<compile_context>
chip_gen: v5e
topology: v5e:2x2
jax: 0.10.0
libtpu: 0.0.40
codegen_flags: <defaults>
</compile_context>

<pallas_src>
import functools

import jax
import jax.numpy as jnp
from jax.experimental import pallas as pl
from jax.experimental.pallas import tpu as pltpu


def _round_up(n, m):
    return ((n + m - 1) // m) * m


# ----------------------------- glue (reference only) ----------------------- #
def aa_to_rotmat(aa):
    """Axis-angle (B,3) -> rotation matrix (B,3,3) via Rodrigues (reference)."""
    theta = jnp.sqrt(jnp.sum(aa * aa, axis=-1) + 1e-12)
    k = aa / theta[:, None]
    kx, ky, kz = k[:, 0], k[:, 1], k[:, 2]
    z = jnp.zeros_like(kx)
    K = jnp.stack(
        [jnp.stack([z, -kz, ky], -1),
         jnp.stack([kz, z, -kx], -1),
         jnp.stack([-ky, kx, z], -1)], -2)
    I = jnp.eye(3, dtype=aa.dtype)[None]
    s = jnp.sin(theta)[:, None, None]
    c = (1.0 - jnp.cos(theta))[:, None, None]
    return I + s * K + c * (K @ K)


# --------------------------- init-time packing ------------------------------ #
def pack_mano_blend(template, posedirs, shapedirs, *, extra_rows=6, lane=128):
    """One-time (model init) packing of the synthetic-MANO blend shapes.

    template (Nh,3), posedirs (P,Nh,3), shapedirs (S,Nh,3)   [PyTorch layout]
      -> W    (P+S+extra_rows, 3*Nhp)  coord-major columns, vertex count padded
              to a multiple of `lane`; last `extra_rows` rows are zero so the
              consolidated small input [pose|shape|rot_aa|tsl] can feed the
              MXU matmul directly.
         bias (1, 3*Nhp)               zero-filled in the padded columns.
    """
    P, Nh, _ = posedirs.shape
    S = shapedirs.shape[0]
    Nhp = _round_up(Nh, lane)
    pad = Nhp - Nh
    pd = jnp.pad(posedirs, ((0, 0), (0, pad), (0, 0)))
    sd = jnp.pad(shapedirs, ((0, 0), (0, pad), (0, 0)))
    tp = jnp.pad(template, ((0, pad), (0, 0)))
    Wp = jnp.transpose(pd, (0, 2, 1)).reshape(P, 3 * Nhp)
    Ws = jnp.transpose(sd, (0, 2, 1)).reshape(S, 3 * Nhp)
    Wz = jnp.zeros((extra_rows, 3 * Nhp), dtype=template.dtype)
    W = jnp.concatenate([Wp, Ws, Wz], axis=0)                     # (P+S+6, 3*Nhp)
    bias = jnp.transpose(tp, (1, 0)).reshape(1, 3 * Nhp)          # (1, 3*Nhp)
    return W, bias


def _maybe_pad_cf(x_cf, n_pad):
    """Zero-pad a channel-first (B,3,N) cloud to N==n_pad (no-op if aligned)."""
    n = x_cf.shape[2]
    if n == n_pad:
        return x_cf
    return jnp.pad(x_cf, ((0, 0), (0, 0), (0, n_pad - n)))


# ------------------------------ Pallas kernel ------------------------------ #
def geo_kernel(small_ref, hvp_ref, w_ref, bias_ref, ovc_ref, onc_ref,
               hv_out, ov_out, on_out, tsl_out, *, PS, Nhp, Nh_true, Nop):
    small = small_ref[...]                                         # (bt, PS+6)

    # ---- fused MANO blend shapes: one MXU matmul (bt, PS+6) @ (PS+6, 3*Nhp)
    # (last 6 rows of W are zero, so the rot/tsl lanes contribute nothing)
    verts_rel = (jnp.dot(small, w_ref[...],
                         preferred_element_type=jnp.float32)
                 + bias_ref[...])                                  # (bt, 3*Nhp)
    diff = hvp_ref[...] - verts_rel                                # (bt, 3*Nhp)

    # per-coord hand translation: lane reductions over 128-aligned chunks,
    # divided by the TRUE vertex count (padding columns are exactly zero).
    inv_nh = 1.0 / float(Nh_true)
    for c in range(3):                                             # unrolled
        lo = c * Nhp
        tsl_c = jnp.sum(diff[:, lo:lo + Nhp], axis=-1, keepdims=True) * inv_nh
        hv_out[:, lo:lo + Nhp] = verts_rel[:, lo:lo + Nhp] + tsl_c
        tsl_out[:, c:c + 1] = tsl_c                                # tiny store

    # ---- Rodrigues in-kernel (VPU + EUP sin/cos) ----
    aa = small[:, PS:PS + 3]                                       # (bt, 3)
    t = small[:, PS + 3:PS + 6]                                    # (bt, 3)
    th = jnp.sqrt(jnp.sum(aa * aa, axis=-1, keepdims=True) + 1e-12)
    k = aa / th
    kx, ky, kz = k[:, 0:1], k[:, 1:2], k[:, 2:3]
    s = jnp.sin(th)
    cth = jnp.cos(th)
    oc = 1.0 - cth
    R = [[cth + oc * kx * kx, oc * kx * ky - s * kz, oc * kx * kz + s * ky],
         [oc * kx * ky + s * kz, cth + oc * ky * ky, oc * ky * kz - s * kx],
         [oc * kx * kz - s * ky, oc * ky * kz + s * kx, cth + oc * kz * kz]]

    # ---- object Rt transform / normal rotation: VPU broadcast sums ----
    V = ovc_ref[...]                                               # (bt, 3*Nop)
    Nrm = onc_ref[...]
    Vc = [V[:, j * Nop:(j + 1) * Nop] for j in range(3)]
    Nc = [Nrm[:, j * Nop:(j + 1) * Nop] for j in range(3)]
    for i in range(3):                                             # unrolled
        rv = R[i][0] * Vc[0] + R[i][1] * Vc[1] + R[i][2] * Vc[2] + t[:, i:i + 1]
        rn = R[i][0] * Nc[0] + R[i][1] * Nc[1] + R[i][2] * Nc[2]
        ov_out[:, i * Nop:(i + 1) * Nop] = rv                      # 128-aligned
        on_out[:, i * Nop:(i + 1) * Nop] = rn                      # unmasked


# --------------------------------- wrapper --------------------------------- #
def _auto_batch_tile(B, row_bytes, fixed_bytes, budget=40 << 20):
    """Largest bt (multiple of 8, dividing B, nb>=2) fitting the VMEM budget."""
    if B < 16 or B % 8 != 0:
        return B
    bt = 8
    c = 8
    while c * 2 <= B:
        if B % c == 0 and (2 * c * row_bytes + fixed_bytes) <= budget:
            bt = c
        c += 8
    return bt


def geo_optimizer_forward(hand_pose, hand_shape, hand_verts_pred_cf,
                          blend_w, blend_b,
                          obj_rot_aa, obj_tsl,
                          obj_verts_can_cf, obj_normals_can_cf,
                          *, batch_tile=None, single_buffer_weights=False,
                          hand_n_verts=None, obj_n_verts=None):
    """Lane-dense (channel-first) forward.

    hand_pose (B,P), hand_shape (B,S), obj_rot_aa (B,3), obj_tsl (B,3),
    point clouds channel-first: hand_verts_pred_cf (B,3,Nh),
    obj_verts_can_cf / obj_normals_can_cf (B,3,No).
    blend_w/blend_b come from pack_mano_blend() (packed once at model init,
    vertex count already padded to a multiple of 128).

    Returns channel-first outputs (B,3,Nh)/(B,3,No) plus hand_tsl (B,3).
    """
    B, P = hand_pose.shape
    S = hand_shape.shape[1]
    PS = P + S
    PSX = PS + 6
    assert blend_w.shape[0] == PSX, "blend_w must be packed with extra_rows=6"
    Nhp = blend_b.shape[1] // 3

    Nh_in = hand_verts_pred_cf.shape[2]
    No_in = obj_verts_can_cf.shape[2]
    if hand_n_verts is None:
        hand_n_verts = Nh_in
    if obj_n_verts is None:
        obj_n_verts = No_in
    Nop = _round_up(No_in, 128)

    # lane-aligned, zero-filled padding of the point clouds (no-op when the
    # data pipeline already produces 128-aligned channel-first clouds)
    hvp_cf = _maybe_pad_cf(hand_verts_pred_cf, Nhp)
    ovc_cf = _maybe_pad_cf(obj_verts_can_cf, Nop)
    onc_cf = _maybe_pad_cf(obj_normals_can_cf, Nop)

    # consolidated tiny per-row input: [hand_pose | hand_shape | rot_aa | tsl]
    small = jnp.concatenate([hand_pose, hand_shape, obj_rot_aa, obj_tsl], -1)
    hvp = hvp_cf.reshape(B, 3 * Nhp)      # contiguous merges; free at XLA level
    ovc = ovc_cf.reshape(B, 3 * Nop)
    onc = onc_cf.reshape(B, 3 * Nop)

    # ---- generation-aware batch tiling + explicit VMEM limit ----
    row_bytes = 4 * (PSX + 2 * 3 * Nhp + 4 * 3 * Nop + 3)
    w_bufs = 1 if single_buffer_weights else 2
    fixed_bytes = w_bufs * PSX * 3 * Nhp * 4 + 2 * 3 * Nhp * 4
    bt = _auto_batch_tile(B, row_bytes, fixed_bytes) if batch_tile is None else batch_tile
    assert B % bt == 0 and (bt == B or bt % 8 == 0), "batch tile must fill sublanes"
    nb = B // bt
    vmem_needed = 2 * bt * row_bytes + fixed_bytes + (2 << 20)
    vmem_limit = int(min(max(vmem_needed, 32 << 20), 48 << 20))

    kernel = functools.partial(geo_kernel, PS=PS, Nhp=Nhp,
                               Nh_true=hand_n_verts, Nop=Nop)

    w_spec_kwargs = {}
    if single_buffer_weights:
        # grid-invariant weight: one VMEM buffer instead of two (v7x headroom)
        w_spec_kwargs = dict(pipeline_mode=pl.Buffered(1))
    w_spec = pl.BlockSpec((PSX, 3 * Nhp), lambda i: (0, 0), **w_spec_kwargs)
    b_spec = pl.BlockSpec((1, 3 * Nhp), lambda i: (0, 0), **w_spec_kwargs)

    out_shapes = (
        jax.ShapeDtypeStruct((B, 3 * Nhp), jnp.float32),   # hand_verts_final
        jax.ShapeDtypeStruct((B, 3 * Nop), jnp.float32),   # obj_verts_final
        jax.ShapeDtypeStruct((B, 3 * Nop), jnp.float32),   # obj_normals_final
        jax.ShapeDtypeStruct((B, 3), jnp.float32),         # hand_tsl_final
    )

    grid_spec = pltpu.PrefetchScalarGridSpec(
        num_scalar_prefetch=0,
        grid=(nb,),
        in_specs=[
            pl.BlockSpec((bt, PSX), lambda i: (i, 0)),         # [pose|shape|rot|tsl]
            pl.BlockSpec((bt, 3 * Nhp), lambda i: (i, 0)),     # hand_verts_pred
            w_spec,                                            # packed blend W
            b_spec,                                            # packed bias
            pl.BlockSpec((bt, 3 * Nop), lambda i: (i, 0)),     # obj_verts_can
            pl.BlockSpec((bt, 3 * Nop), lambda i: (i, 0)),     # obj_normals_can
        ],
        out_specs=[
            pl.BlockSpec((bt, 3 * Nhp), lambda i: (i, 0)),
            pl.BlockSpec((bt, 3 * Nop), lambda i: (i, 0)),
            pl.BlockSpec((bt, 3 * Nop), lambda i: (i, 0)),
            pl.BlockSpec((bt, 3), lambda i: (i, 0)),
        ],
    )

    hv, ov, on, tsl = pl.pallas_call(
        kernel,
        out_shape=out_shapes,
        grid_spec=grid_spec,
        compiler_params=pltpu.CompilerParams(
            dimension_semantics=("parallel",),     # batch-tile axis (megacore)
            vmem_limit_bytes=vmem_limit),
    )(small, hvp, blend_w, blend_b, ovc, onc)

    hv_cf = hv.reshape(B, 3, Nhp)
    ov_cf = ov.reshape(B, 3, Nop)
    on_cf = on.reshape(B, 3, Nop)
    if Nhp != hand_n_verts:
        hv_cf = hv_cf[:, :, :hand_n_verts]
    if Nop != obj_n_verts:
        ov_cf = ov_cf[:, :, :obj_n_verts]
        on_cf = on_cf[:, :, :obj_n_verts]

    return dict(
        hand_verts_final=hv_cf,
        hand_tsl_final=tsl,
        obj_verts_final=ov_cf,
        obj_normals_final=on_cf,
    )


# ------------------------------ pure-JAX ref ------------------------------- #
def reference(hand_pose, hand_shape, hand_verts_pred, template, posedirs,
              shapedirs, obj_rot_aa, obj_tsl, obj_verts_can, obj_normals_can):
    """PyTorch-layout reference (B, N, 3)."""
    verts_rel = (template[None]
                 + jnp.einsum('bp,pvc->bvc', hand_pose, posedirs)
                 + jnp.einsum('bs,svc->bvc', hand_shape, shapedirs))
    hand_tsl = jnp.mean(hand_verts_pred - verts_rel, axis=1)
    hand_verts_final = verts_rel + hand_tsl[:, None, :]
    R = aa_to_rotmat(obj_rot_aa)
    obj_verts_final = jnp.einsum('bij,bnj->bni', R, obj_verts_can) + obj_tsl[:, None, :]
    obj_normals_final = jnp.einsum('bij,bnj->bni', R, obj_normals_can)
    return dict(hand_verts_final=hand_verts_final, hand_tsl_final=hand_tsl,
                obj_verts_final=obj_verts_final, obj_normals_final=obj_normals_final)


# ---------------------------------- main ----------------------------------- #
if __name__ == "__main__":
    B, P, S, Nh, No = 2, 48, 10, 128, 128
    key = jax.random.PRNGKey(0)
    ks = jax.random.split(key, 10)

    # deterministic synthetic "MANO" parameters (PyTorch layout)
    template = 0.1 * jax.random.normal(ks[0], (Nh, 3), jnp.float32)
    posedirs = 0.01 * jax.random.normal(ks[1], (P, Nh, 3), jnp.float32)
    shapedirs = 0.01 * jax.random.normal(ks[2], (S, Nh, 3), jnp.float32)

    # deterministic synthetic inputs (stand-ins for HONet predictions)
    hand_pose = 0.1 * jax.random.normal(ks[3], (B, P), jnp.float32)
    hand_shape = 0.1 * jax.random.normal(ks[4], (B, S), jnp.float32)
    hand_verts_pred = 0.1 * jax.random.normal(ks[5], (B, Nh, 3), jnp.float32)
    obj_verts_can = 0.1 * jax.random.normal(ks[6], (B, No, 3), jnp.float32)
    obj_normals_can = jax.random.normal(ks[7], (B, No, 3), jnp.float32)
    obj_normals_can = obj_normals_can / jnp.linalg.norm(
        obj_normals_can, axis=-1, keepdims=True)
    obj_rot_aa = 0.5 * jax.random.normal(ks[8], (B, 3), jnp.float32)
    obj_tsl = 0.2 * jax.random.normal(ks[9], (B, 3), jnp.float32)

    # --- model-init time: pack (and 128-pad) constant blend shapes ONCE ---
    blend_w, blend_b = pack_mano_blend(template, posedirs, shapedirs)
    blend_w = jax.block_until_ready(blend_w)
    blend_b = jax.block_until_ready(blend_b)

    # --- data-pipeline time: lane-dense (channel-first) point clouds, ONCE ---
    hand_verts_pred_cf = jnp.transpose(hand_verts_pred, (0, 2, 1))   # (B,3,Nh)
    obj_verts_can_cf = jnp.transpose(obj_verts_can, (0, 2, 1))       # (B,3,No)
    obj_normals_can_cf = jnp.transpose(obj_normals_can, (0, 2, 1))   # (B,3,No)

    fwd = jax.jit(functools.partial(geo_optimizer_forward,
                                    hand_n_verts=Nh, obj_n_verts=No))
    out = fwd(hand_pose, hand_shape, hand_verts_pred_cf,
              blend_w, blend_b, obj_rot_aa, obj_tsl,
              obj_verts_can_cf, obj_normals_can_cf)
    jax.block_until_ready(out)

    # correctness check vs PyTorch-layout reference (transposes here are test
    # harness only, not part of the forward path)
    ref = reference(hand_pose, hand_shape, hand_verts_pred, template, posedirs,
                    shapedirs, obj_rot_aa, obj_tsl, obj_verts_can, obj_normals_can)
    checks = {
        "hand_verts_final": (jnp.transpose(out["hand_verts_final"], (0, 2, 1)),
                             ref["hand_verts_final"]),
        "hand_tsl_final": (out["hand_tsl_final"], ref["hand_tsl_final"]),
        "obj_verts_final": (jnp.transpose(out["obj_verts_final"], (0, 2, 1)),
                            ref["obj_verts_final"]),
        "obj_normals_final": (jnp.transpose(out["obj_normals_final"], (0, 2, 1)),
                              ref["obj_normals_final"]),
    }
    for name, (got, want) in checks.items():
        assert jnp.allclose(got, want, atol=1e-4, rtol=1e-4), name

    print("KERNEL_OK")
</pallas_src>

<mosaic_0001>
module attributes {stable_mosaic.version = 11 : i64} {
  func.func @geo_kernel(%arg0: i32, %arg1: memref<2x64xf32, #tpu.memory_space<vmem>>, %arg2: memref<2x384xf32, #tpu.memory_space<vmem>>, %arg3: memref<64x384xf32, #tpu.memory_space<vmem>>, %arg4: memref<1x384xf32, #tpu.memory_space<vmem>>, %arg5: memref<2x384xf32, #tpu.memory_space<vmem>>, %arg6: memref<2x384xf32, #tpu.memory_space<vmem>>, %arg7: memref<2x384xf32, #tpu.memory_space<vmem>>, %arg8: memref<2x384xf32, #tpu.memory_space<vmem>>, %arg9: memref<2x384xf32, #tpu.memory_space<vmem>>, %arg10: memref<2x3xf32, #tpu.memory_space<vmem>>) attributes {dimension_semantics = [#tpu.dimension_semantics<parallel>], iteration_bounds = array<i64: 1>, scalar_prefetch = 0 : i64, scratch_operands = 0 : i64, tpu.core_type = #tpu.core_type<tc>, window_params = [{transform_indices = @transform_0, window_bounds = array<i64: 2, 64>}, {transform_indices = @transform_1, window_bounds = array<i64: 2, 384>}, {pipeline_mode = #tpu.pipeline_mode<synchronous>, transform_indices = @transform_2, window_bounds = array<i64: 64, 384>}, {pipeline_mode = #tpu.pipeline_mode<synchronous>, transform_indices = @transform_3, window_bounds = array<i64: 1, 384>}, {transform_indices = @transform_4, window_bounds = array<i64: 2, 384>}, {transform_indices = @transform_5, window_bounds = array<i64: 2, 384>}, {transform_indices = @transform_6, window_bounds = array<i64: 2, 384>}, {transform_indices = @transform_7, window_bounds = array<i64: 2, 384>}, {transform_indices = @transform_8, window_bounds = array<i64: 2, 384>}, {transform_indices = @transform_9, window_bounds = array<i64: 2, 3>}]} {
    %c0 = arith.constant 0 : index
    %c0_0 = arith.constant 0 : index
    %0 = vector.load %arg1[%c0, %c0_0] : memref<2x64xf32, #tpu.memory_space<vmem>>, vector<2x64xf32>
    %c0_1 = arith.constant 0 : index
    %c0_2 = arith.constant 0 : index
    %1 = vector.load %arg3[%c0_1, %c0_2] : memref<64x384xf32, #tpu.memory_space<vmem>>, vector<64x384xf32>
    %cst = arith.constant dense<0.000000e+00> : vector<2x384xf32>
    %2 = tpu.matmul %0, %1, %cst {dimension_numbers = #tpu.dot_dimension_numbers<[1], [0], [0], [1], [0, 0, 1, 1], [], []>} : vector<2x64xf32>, vector<64x384xf32>, vector<2x384xf32> -> vector<2x384xf32>
    %c0_3 = arith.constant 0 : index
    %c0_4 = arith.constant 0 : index
    %3 = vector.load %arg4[%c0_3, %c0_4] : memref<1x384xf32, #tpu.memory_space<vmem>>, vector<1x384xf32>
    %4 = vector.broadcast %3 : vector<1x384xf32> to vector<2x384xf32>
    %5 = arith.addf %2, %4 : vector<2x384xf32>
    %c0_5 = arith.constant 0 : index
    %c0_6 = arith.constant 0 : index
    %6 = vector.load %arg2[%c0_5, %c0_6] : memref<2x384xf32, #tpu.memory_space<vmem>>, vector<2x384xf32>
    %7 = arith.subf %6, %5 : vector<2x384xf32>
    %8 = vector.extract_strided_slice %7 {offsets = [0, 0], sizes = [2, 128], strides = [1, 1]} : vector<2x384xf32> to vector<2x128xf32>
    %cst_7 = arith.constant dense<0.000000e+00> : vector<2xf32>
    %9 = vector.multi_reduction <add>, %8, %cst_7 [1] : vector<2x128xf32> to vector<2xf32>
    %10 = vector.shape_cast %9 : vector<2xf32> to vector<2x1xf32>
    %cst_8 = arith.constant 7.812500e-03 : f32
    %11 = vector.broadcast %cst_8 : f32 to vector<2x1xf32>
    %12 = arith.mulf %10, %11 : vector<2x1xf32>
    %13 = vector.extract_strided_slice %5 {offsets = [0, 0], sizes = [2, 128], strides = [1, 1]} : vector<2x384xf32> to vector<2x128xf32>
    %14 = vector.broadcast %12 : vector<2x1xf32> to vector<2x128xf32>
    %15 = arith.addf %13, %14 : vector<2x128xf32>
    %c0_9 = arith.constant 0 : index
    %c0_10 = arith.constant 0 : index
    %16 = vector.load %arg7[%c0_9, %c0_10] : memref<2x384xf32, #tpu.memory_space<vmem>>, vector<2x128xf32>
    tpu.vector_store %arg7[%c0_9, %c0_10], %15 {strides = array<i32>} : memref<2x384xf32, #tpu.memory_space<vmem>>, vector<2x128xf32>,
    %c0_11 = arith.constant 0 : index
    %c0_12 = arith.constant 0 : index
    %17 = vector.load %arg10[%c0_11, %c0_12] : memref<2x3xf32, #tpu.memory_space<vmem>>, vector<2x1xf32>
    tpu.vector_store %arg10[%c0_11, %c0_12], %12 {strides = array<i32>} : memref<2x3xf32, #tpu.memory_space<vmem>>, vector<2x1xf32>,
    %18 = vector.extract_strided_slice %7 {offsets = [0, 128], sizes = [2, 128], strides = [1, 1]} : vector<2x384xf32> to vector<2x128xf32>
    %cst_13 = arith.constant dense<0.000000e+00> : vector<2xf32>
    %19 = vector.multi_reduction <add>, %18, %cst_13 [1] : vector<2x128xf32> to vector<2xf32>
    %20 = vector.shape_cast %19 : vector<2xf32> to vector<2x1xf32>
    %cst_14 = arith.constant 7.812500e-03 : f32
    %21 = vector.broadcast %cst_14 : f32 to vector<2x1xf32>
    %22 = arith.mulf %20, %21 : vector<2x1xf32>
    %23 = vector.extract_strided_slice %5 {offsets = [0, 128], sizes = [2, 128], strides = [1, 1]} : vector<2x384xf32> to vector<2x128xf32>
    %24 = vector.broadcast %22 : vector<2x1xf32> to vector<2x128xf32>
    %25 = arith.addf %23, %24 : vector<2x128xf32>
    %c0_15 = arith.constant 0 : index
    %c128 = arith.constant 128 : index
    %26 = vector.load %arg7[%c0_15, %c128] : memref<2x384xf32, #tpu.memory_space<vmem>>, vector<2x128xf32>
    tpu.vector_store %arg7[%c0_15, %c128], %25 {strides = array<i32>} : memref<2x384xf32, #tpu.memory_space<vmem>>, vector<2x128xf32>,
    %c0_16 = arith.constant 0 : index
    %c1 = arith.constant 1 : index
    %27 = vector.load %arg10[%c0_16, %c1] : memref<2x3xf32, #tpu.memory_space<vmem>>, vector<2x1xf32>
    tpu.vector_store %arg10[%c0_16, %c1], %22 {strides = array<i32>} : memref<2x3xf32, #tpu.memory_space<vmem>>, vector<2x1xf32>,
    %28 = vector.extract_strided_slice %7 {offsets = [0, 256], sizes = [2, 128], strides = [1, 1]} : vector<2x384xf32> to vector<2x128xf32>
    %cst_17 = arith.constant dense<0.000000e+00> : vector<2xf32>
    %29 = vector.multi_reduction <add>, %28, %cst_17 [1] : vector<2x128xf32> to vector<2xf32>
    %30 = vector.shape_cast %29 : vector<2xf32> to vector<2x1xf32>
    %cst_18 = arith.constant 7.812500e-03 : f32
    %31 = vector.broadcast %cst_18 : f32 to vector<2x1xf32>
    %32 = arith.mulf %30, %31 : vector<2x1xf32>
    %33 = vector.extract_strided_slice %5 {offsets = [0, 256], sizes = [2, 128], strides = [1, 1]} : vector<2x384xf32> to vector<2x128xf32>
    %34 = vector.broadcast %32 : vector<2x1xf32> to vector<2x128xf32>
    %35 = arith.addf %33, %34 : vector<2x128xf32>
    %c0_19 = arith.constant 0 : index
    %c256 = arith.constant 256 : index
    %36 = vector.load %arg7[%c0_19, %c256] : memref<2x384xf32, #tpu.memory_space<vmem>>, vector<2x128xf32>
    tpu.vector_store %arg7[%c0_19, %c256], %35 {strides = array<i32>} : memref<2x384xf32, #tpu.memory_space<vmem>>, vector<2x128xf32>,
    %c0_20 = arith.constant 0 : index
    %c2 = arith.constant 2 : index
    %37 = vector.load %arg10[%c0_20, %c2] : memref<2x3xf32, #tpu.memory_space<vmem>>, vector<2x1xf32>
    tpu.vector_store %arg10[%c0_20, %c2], %32 {strides = array<i32>} : memref<2x3xf32, #tpu.memory_space<vmem>>, vector<2x1xf32>,
    %38 = vector.extract_strided_slice %0 {offsets = [0, 58], sizes = [2, 3], strides = [1, 1]} : vector<2x64xf32> to vector<2x3xf32>
    %39 = vector.extract_strided_slice %0 {offsets = [0, 61], sizes = [2, 3], strides = [1, 1]} : vector<2x64xf32> to vector<2x3xf32>
    %40 = arith.mulf %38, %38 : vector<2x3xf32>
    %cst_21 = arith.constant dense<0.000000e+00> : vector<2xf32>
    %41 = vector.multi_reduction <add>, %40, %cst_21 [1] : vector<2x3xf32> to vector<2xf32>
    %42 = vector.shape_cast %41 : vector<2xf32> to vector<2x1xf32>
    %cst_22 = arith.constant 9.99999996E-13 : f32
    %43 = vector.broadcast %cst_22 : f32 to vector<2x1xf32>
    %44 = arith.addf %42, %43 : vector<2x1xf32>
    %45 = math.sqrt %44 : vector<2x1xf32>
    %46 = vector.broadcast %45 : vector<2x1xf32> to vector<2x3xf32>
    %47 = arith.divf %38, %46 : vector<2x3xf32>
    %48 = vector.extract_strided_slice %47 {offsets = [0, 0], sizes = [2, 1], strides = [1, 1]} : vector<2x3xf32> to vector<2x1xf32>
    %49 = vector.extract_strided_slice %47 {offsets = [0, 1], sizes = [2, 1], strides = [1, 1]} : vector<2x3xf32> to vector<2x1xf32>
    %50 = vector.extract_strided_slice %47 {offsets = [0, 2], sizes = [2, 1], strides = [1, 1]} : vector<2x3xf32> to vector<2x1xf32>
    %51 = math.sin %45 : vector<2x1xf32>
    %52 = math.cos %45 : vector<2x1xf32>
    %cst_23 = arith.constant 1.000000e+00 : f32
    %53 = vector.broadcast %cst_23 : f32 to vector<2x1xf32>
    %54 = arith.subf %53, %52 : vector<2x1xf32>
    %55 = arith.mulf %54, %48 : vector<2x1xf32>
    %56 = arith.mulf %55, %48 : vector<2x1xf32>
    %57 = arith.addf %52, %56 : vector<2x1xf32>
    %58 = arith.mulf %54, %48 : vector<2x1xf32>
    %59 = arith.mulf %58, %49 : vector<2x1xf32>
    %60 = arith.mulf %51, %50 : vector<2x1xf32>
    %61 = arith.subf %59, %60 : vector<2x1xf32>
    %62 = arith.mulf %54, %48 : vector<2x1xf32>
    %63 = arith.mulf %62, %50 : vector<2x1xf32>
    %64 = arith.mulf %51, %49 : vector<2x1xf32>
    %65 = arith.addf %63, %64 : vector<2x1xf32>
    %66 = arith.mulf %54, %48 : vector<2x1xf32>
    %67 = arith.mulf %66, %49 : vector<2x1xf32>
    %68 = arith.mulf %51, %50 : vector<2x1xf32>
    %69 = arith.addf %67, %68 : vector<2x1xf32>
    %70 = arith.mulf %54, %49 : vector<2x1xf32>
    %71 = arith.mulf %70, %49 : vector<2x1xf32>
    %72 = arith.addf %52, %71 : vector<2x1xf32>
    %73 = arith.mulf %54, %49 : vector<2x1xf32>
    %74 = arith.mulf %73, %50 : vector<2x1xf32>
    %75 = arith.mulf %51, %48 : vector<2x1xf32>
    %76 = arith.subf %74, %75 : vector<2x1xf32>
    %77 = arith.mulf %54, %48 : vector<2x1xf32>
    %78 = arith.mulf %77, %50 : vector<2x1xf32>
    %79 = arith.mulf %51, %49 : vector<2x1xf32>
    %80 = arith.subf %78, %79 : vector<2x1xf32>
    %81 = arith.mulf %54, %49 : vector<2x1xf32>
    %82 = arith.mulf %81, %50 : vector<2x1xf32>
    %83 = arith.mulf %51, %48 : vector<2x1xf32>
    %84 = arith.addf %82, %83 : vector<2x1xf32>
    %85 = arith.mulf %54, %50 : vector<2x1xf32>
    %86 = arith.mulf %85, %50 : vector<2x1xf32>
    %87 = arith.addf %52, %86 : vector<2x1xf32>
    %c0_24 = arith.constant 0 : index
    %c0_25 = arith.constant 0 : index
    %88 = vector.load %arg5[%c0_24, %c0_25] : memref<2x384xf32, #tpu.memory_space<vmem>>, vector<2x384xf32>
    %c0_26 = arith.constant 0 : index
    %c0_27 = arith.constant 0 : index
    %89 = vector.load %arg6[%c0_26, %c0_27] : memref<2x384xf32, #tpu.memory_space<vmem>>, vector<2x384xf32>
    %90 = vector.extract_strided_slice %88 {offsets = [0, 0], sizes = [2, 128], strides = [1, 1]} : vector<2x384xf32> to vector<2x128xf32>
    %91 = vector.extract_strided_slice %88 {offsets = [0, 128], sizes = [2, 128], strides = [1, 1]} : vector<2x384xf32> to vector<2x128xf32>
    %92 = vector.extract_strided_slice %88 {offsets = [0, 256], sizes = [2, 128], strides = [1, 1]} : vector<2x384xf32> to vector<2x128xf32>
    %93 = vector.extract_strided_slice %89 {offsets = [0, 0], sizes = [2, 128], strides = [1, 1]} : vector<2x384xf32> to vector<2x128xf32>
    %94 = vector.extract_strided_slice %89 {offsets = [0, 128], sizes = [2, 128], strides = [1, 1]} : vector<2x384xf32> to vector<2x128xf32>
    %95 = vector.extract_strided_slice %89 {offsets = [0, 256], sizes = [2, 128], strides = [1, 1]} : vector<2x384xf32> to vector<2x128xf32>
    %96 = vector.broadcast %57 : vector<2x1xf32> to vector<2x128xf32>
    %97 = arith.mulf %96, %90 : vector<2x128xf32>
    %98 = vector.broadcast %61 : vector<2x1xf32> to vector<2x128xf32>
    %99 = arith.mulf %98, %91 : vector<2x128xf32>
    %100 = arith.addf %97, %99 : vector<2x128xf32>
    %101 = vector.broadcast %65 : vector<2x1xf32> to vector<2x128xf32>
    %102 = arith.mulf %101, %92 : vector<2x128xf32>
    %103 = arith.addf %100, %102 : vector<2x128xf32>
    %104 = vector.extract_strided_slice %39 {offsets = [0, 0], sizes = [2, 1], strides = [1, 1]} : vector<2x3xf32> to vector<2x1xf32>
    %105 = vector.broadcast %104 : vector<2x1xf32> to vector<2x128xf32>
    %106 = arith.addf %103, %105 : vector<2x128xf32>
    %107 = vector.broadcast %57 : vector<2x1xf32> to vector<2x128xf32>
    %108 = arith.mulf %107, %93 : vector<2x128xf32>
    %109 = vector.broadcast %61 : vector<2x1xf32> to vector<2x128xf32>
    %110 = arith.mulf %109, %94 : vector<2x128xf32>
    %111 = arith.addf %108, %110 : vector<2x128xf32>
    %112 = vector.broadcast %65 : vector<2x1xf32> to vector<2x128xf32>
    %113 = arith.mulf %112, %95 : vector<2x128xf32>
    %114 = arith.addf %111, %113 : vector<2x128xf32>
    %c0_28 = arith.constant 0 : index
    %c0_29 = arith.constant 0 : index
    %115 = vector.load %arg8[%c0_28, %c0_29] : memref<2x384xf32, #tpu.memory_space<vmem>>, vector<2x128xf32>
    tpu.vector_store %arg8[%c0_28, %c0_29], %106 {strides = array<i32>} : memref<2x384xf32, #tpu.memory_space<vmem>>, vector<2x128xf32>,
    %c0_30 = arith.constant 0 : index
    %c0_31 = arith.constant 0 : index
    %116 = vector.load %arg9[%c0_30, %c0_31] : memref<2x384xf32, #tpu.memory_space<vmem>>, vector<2x128xf32>
    tpu.vector_store %arg9[%c0_30, %c0_31], %114 {strides = array<i32>} : memref<2x384xf32, #tpu.memory_space<vmem>>, vector<2x128xf32>,
    %117 = vector.broadcast %69 : vector<2x1xf32> to vector<2x128xf32>
    %118 = arith.mulf %117, %90 : vector<2x128xf32>
    %119 = vector.broadcast %72 : vector<2x1xf32> to vector<2x128xf32>
    %120 = arith.mulf %119, %91 : vector<2x128xf32>
    %121 = arith.addf %118, %120 : vector<2x128xf32>
    %122 = vector.broadcast %76 : vector<2x1xf32> to vector<2x128xf32>
    %123 = arith.mulf %122, %92 : vector<2x128xf32>
    %124 = arith.addf %121, %123 : vector<2x128xf32>
    %125 = vector.extract_strided_slice %39 {offsets = [0, 1], sizes = [2, 1], strides = [1, 1]} : vector<2x3xf32> to vector<2x1xf32>
    %126 = vector.broadcast %125 : vector<2x1xf32> to vector<2x128xf32>
    %127 = arith.addf %124, %126 : vector<2x128xf32>
    %128 = vector.broadcast %69 : vector<2x1xf32> to vector<2x128xf32>
    %129 = arith.mulf %128, %93 : vector<2x128xf32>
    %130 = vector.broadcast %72 : vector<2x1xf32> to vector<2x128xf32>
    %131 = arith.mulf %130, %94 : vector<2x128xf32>
    %132 = arith.addf %129, %131 : vector<2x128xf32>
    %133 = vector.broadcast %76 : vector<2x1xf32> to vector<2x128xf32>
    %134 = arith.mulf %133, %95 : vector<2x128xf32>
    %135 = arith.addf %132, %134 : vector<2x128xf32>
    %c0_32 = arith.constant 0 : index
    %c128_33 = arith.constant 128 : index
    %136 = vector.load %arg8[%c0_32, %c128_33] : memref<2x384xf32, #tpu.memory_space<vmem>>, vector<2x128xf32>
    tpu.vector_store %arg8[%c0_32, %c128_33], %127 {strides = array<i32>} : memref<2x384xf32, #tpu.memory_space<vmem>>, vector<2x128xf32>,
    %c0_34 = arith.constant 0 : index
    %c128_35 = arith.constant 128 : index
    %137 = vector.load %arg9[%c0_34, %c128_35] : memref<2x384xf32, #tpu.memory_space<vmem>>, vector<2x128xf32>
    tpu.vector_store %arg9[%c0_34, %c128_35], %135 {strides = array<i32>} : memref<2x384xf32, #tpu.memory_space<vmem>>, vector<2x128xf32>,
    %138 = vector.broadcast %80 : vector<2x1xf32> to vector<2x128xf32>
    %139 = arith.mulf %138, %90 : vector<2x128xf32>
    %140 = vector.broadcast %84 : vector<2x1xf32> to vector<2x128xf32>
    %141 = arith.mulf %140, %91 : vector<2x128xf32>
    %142 = arith.addf %139, %141 : vector<2x128xf32>
    %143 = vector.broadcast %87 : vector<2x1xf32> to vector<2x128xf32>
    %144 = arith.mulf %143, %92 : vector<2x128xf32>
    %145 = arith.addf %142, %144 : vector<2x128xf32>
    %146 = vector.extract_strided_slice %39 {offsets = [0, 2], sizes = [2, 1], strides = [1, 1]} : vector<2x3xf32> to vector<2x1xf32>
    %147 = vector.broadcast %146 : vector<2x1xf32> to vector<2x128xf32>
    %148 = arith.addf %145, %147 : vector<2x128xf32>
    %149 = vector.broadcast %80 : vector<2x1xf32> to vector<2x128xf32>
    %150 = arith.mulf %149, %93 : vector<2x128xf32>
    %151 = vector.broadcast %84 : vector<2x1xf32> to vector<2x128xf32>
    %152 = arith.mulf %151, %94 : vector<2x128xf32>
    %153 = arith.addf %150, %152 : vector<2x128xf32>
    %154 = vector.broadcast %87 : vector<2x1xf32> to vector<2x128xf32>
    %155 = arith.mulf %154, %95 : vector<2x128xf32>
    %156 = arith.addf %153, %155 : vector<2x128xf32>
    %c0_36 = arith.constant 0 : index
    %c256_37 = arith.constant 256 : index
    %157 = vector.load %arg8[%c0_36, %c256_37] : memref<2x384xf32, #tpu.memory_space<vmem>>, vector<2x128xf32>
    tpu.vector_store %arg8[%c0_36, %c256_37], %148 {strides = array<i32>} : memref<2x384xf32, #tpu.memory_space<vmem>>, vector<2x128xf32>,
    %c0_38 = arith.constant 0 : index
    %c256_39 = arith.constant 256 : index
    %158 = vector.load %arg9[%c0_38, %c256_39] : memref<2x384xf32, #tpu.memory_space<vmem>>, vector<2x128xf32>
    tpu.vector_store %arg9[%c0_38, %c256_39], %156 {strides = array<i32>} : memref<2x384xf32, #tpu.memory_space<vmem>>, vector<2x128xf32>,
    return
  }
  func.func @transform_0(%arg0: i32) -> (i32, i32) {
    %c0_i32 = arith.constant 0 : i32
    %c0_i32_0 = arith.constant 0 : i32
    return %arg0, %c0_i32 : i32, i32
  }
  func.func @transform_1(%arg0: i32) -> (i32, i32) {
    %c0_i32 = arith.constant 0 : i32
    %c0_i32_0 = arith.constant 0 : i32
    return %arg0, %c0_i32 : i32, i32
  }
  func.func @transform_2(%arg0: i32) -> (i32, i32) {
    %c0_i32 = arith.constant 0 : i32
    %c0_i32_0 = arith.constant 0 : i32
    %c0_i32_1 = arith.constant 0 : i32
    return %c0_i32, %c0_i32_0 : i32, i32
  }
  func.func @transform_3(%arg0: i32) -> (i32, i32) {
    %c0_i32 = arith.constant 0 : i32
    %c0_i32_0 = arith.constant 0 : i32
    %c0_i32_1 = arith.constant 0 : i32
    return %c0_i32, %c0_i32_0 : i32, i32
  }
  func.func @transform_4(%arg0: i32) -> (i32, i32) {
    %c0_i32 = arith.constant 0 : i32
    %c0_i32_0 = arith.constant 0 : i32
    return %arg0, %c0_i32 : i32, i32
  }
  func.func @transform_5(%arg0: i32) -> (i32, i32) {
    %c0_i32 = arith.constant 0 : i32
    %c0_i32_0 = arith.constant 0 : i32
    return %arg0, %c0_i32 : i32, i32
  }
  func.func @transform_6(%arg0: i32) -> (i32, i32) {
    %c0_i32 = arith.constant 0 : i32
    %c0_i32_0 = arith.constant 0 : i32
    return %arg0, %c0_i32 : i32, i32
  }
  func.func @transform_7(%arg0: i32) -> (i32, i32) {
    %c0_i32 = arith.constant 0 : i32
    %c0_i32_0 = arith.constant 0 : i32
    return %arg0, %c0_i32 : i32, i32
  }
  func.func @transform_8(%arg0: i32) -> (i32, i32) {
    %c0_i32 = arith.constant 0 : i32
    %c0_i32_0 = arith.constant 0 : i32
    return %arg0, %c0_i32 : i32, i32
  }
  func.func @transform_9(%arg0: i32) -> (i32, i32) {
    %c0_i32 = arith.constant 0 : i32
    %c0_i32_0 = arith.constant 0 : i32
    return %arg0, %c0_i32 : i32, i32
  }
}

</mosaic_0001>

<llo_original>
// kernel: geo_optimizer_forward.1
$region0: #{geo_optimizer_forward.1}
  #allocation0 [shape = 'u32[]', space=smem, size = 0x4, offset = 0x4, fixed_abs, tag = 'smem constant byte address 0x4 - core index']
  #allocation1 [shape = 'u32[72,128]{1,0:T(1,128)}', space=vmem, size = 0x9000, scoped, tag = 'internal scratch']
  %s0 = inlined_call_operand.vmem [shape: f32[2,64], index: 0, kind: input, shape index: {}]
  %s1 = inlined_call_operand.vmem [shape: f32[2,384], index: 1, kind: input, shape index: {}]
  %s2 = inlined_call_operand.hbm [shape: f32[64,384], index: 2, kind: input, shape index: {}]
  %s3 = inlined_call_operand.vmem [shape: f32[1,384], index: 3, kind: input, shape index: {}]
  %s4 = inlined_call_operand.hbm [shape: f32[2,384], index: 4, kind: input, shape index: {}]
  %s5 = inlined_call_operand.vmem [shape: f32[2,384], index: 5, kind: input, shape index: {}]
  %s6 = inlined_call_operand.hbm [shape: f32[2,384], index: 6, kind: output, shape index: {0}]
  %s7 = inlined_call_operand.hbm [shape: f32[2,384], index: 7, kind: output, shape index: {1}]
  %s8 = inlined_call_operand.hbm [shape: f32[2,384], index: 8, kind: output, shape index: {2}]
  %s9 = inlined_call_operand.hbm [shape: f32[2,3], index: 9, kind: output, shape index: {3}]
  %10 = xla_tuple %s6, %s7, %s8, %s9
  %s11 = sld [smem:[#allocation0]]
  $region66: #{geo_optimizer_forward.1} parent=0
    _
  %s13 = ssub.s32 1, %s11
  %s14 = scalar_select 0, %s13, %s11
  $region1: #{geo_optimizer_forward.1} parent=0
    #allocation2 [shape = 'u8[98304]{0}', space=vmem, size = 0x18000, scoped, tag = 'input window, operand 2, single buffered']
    #allocation3 [shape = 's32[1]{0}', space=sflag, size = 0x4, scoped, tag = 'scoped memory for geo_optimizer_forward.1']
    #allocation4 [shape = 's32[1]{0}', space=sflag, size = 0x4, scoped, tag = 'scoped memory for geo_optimizer_forward.1']
    #allocation5 [shape = 'u8[3072]{0}', space=vmem, size = 0xc00, scoped, tag = 'input window, operand 4, single buffered']
    #allocation6 [shape = 's32[1]{0}', space=sflag, size = 0x4, scoped, tag = 'scoped memory for geo_optimizer_forward.1']
    #allocation7 [shape = 'u8[3072]{0}', space=vmem, size = 0xc00, scoped, tag = 'output window, operand 0, single buffered']
    #allocation8 [shape = 'u8[3072]{0}', space=vmem, size = 0xc00, scoped, tag = 'output window, operand 1, single buffered']
    #allocation9 [shape = 's32[1]{0}', space=sflag, size = 0x4, scoped, tag = 'scoped memory for geo_optimizer_forward.1']
    #allocation10 [shape = 'u8[3072]{0}', space=vmem, size = 0xc00, scoped, tag = 'output window, operand 2, single buffered']
    #allocation11 [shape = 'u8[1024]{0}', space=vmem, size = 0x400, scoped, tag = 'output window, operand 3, single buffered']
    #allocation12 [shape = 's32[1]{0}', space=sflag, size = 0x4, scoped, tag = 'scoped memory for geo_optimizer_forward.1']
    %15 = vsyncpa [#allocation3], 0
    %16 = vsyncpa [#allocation6], 0
    %17 = vsyncpa [#allocation4], 0
    %18 = vsyncpa [#allocation9], 0
    %19 = vsyncpa [#allocation12], 0
    // Predicated region
    $region2: #{geo_optimizer_forward.1} parent=1 // pred_check
      _
    $region3: #{geo_optimizer_forward.1} parent=1 // pred_check_branch
      %21 = sbr.rel (0) target = $region5
    $region4: #{geo_optimizer_forward.1} parent=1 // pred_region
      _
    $region5: #{geo_optimizer_forward.1} parent=1 // pred_fallthru
      _
    // Predicated region
    $region6: #{geo_optimizer_forward.1} parent=1 // pred_check
      _
    $region7: #{geo_optimizer_forward.1} parent=1 // pred_check_branch
      %23 = sbr.rel (0) target = $region9
    $region8: #{geo_optimizer_forward.1} parent=1 // pred_region
      _
    $region9: #{geo_optimizer_forward.1} parent=1 // pred_fallthru
      _
    // Predicated region
    $region10: #{geo_optimizer_forward.1} parent=1 // pred_check
      _
    $region11: #{geo_optimizer_forward.1} parent=1 // pred_check_branch
      %25 = sbr.rel (0) target = $region13
    $region12: #{geo_optimizer_forward.1} parent=1 // pred_region
      %27 = vsyncadd [#allocation3], 0
      %s28 = sshll.u32 %s2, 4
      %s29 = int_to_ptr.hbm [resolvable:$true] %s28
      %s30 = sshll.u32 [#allocation2], 4
      %s31 = int_to_ptr.vmem [resolvable:$true] %s30
      %36 = dma.hbm_to_vmem [thread:$0]  %s29, 3072, %s31, [#allocation3], 384, 384, 24
    $region13: #{geo_optimizer_forward.1} parent=1 // pred_fallthru
      _
    // Predicated region
    $region14: #{geo_optimizer_forward.1} parent=1 // pred_check
      _
    $region15: #{geo_optimizer_forward.1} parent=1 // pred_check_branch
      %38 = sbr.rel (0) target = $region17
    $region16: #{geo_optimizer_forward.1} parent=1 // pred_region
      _
    $region17: #{geo_optimizer_forward.1} parent=1 // pred_fallthru
      _
    // Predicated region
    $region18: #{geo_optimizer_forward.1} parent=1 // pred_check
      _
    $region19: #{geo_optimizer_forward.1} parent=1 // pred_check_branch
      %40 = sbr.rel (0) target = $region21
    $region20: #{geo_optimizer_forward.1} parent=1 // pred_region
      %42 = vsyncadd [#allocation6], 0
      %s44 = sshll.u32 %s4, 4
      %s45 = int_to_ptr.hbm [resolvable:$true] %s44
      %s46 = sshll.u32 [#allocation5], 4
      %s47 = int_to_ptr.vmem [resolvable:$true] %s46
      %49 = dma.hbm_to_vmem [thread:$0]  %s45, 96, %s47, [#allocation6]
    $region21: #{geo_optimizer_forward.1} parent=1 // pred_fallthru
      _
    // Predicated region
    $region22: #{geo_optimizer_forward.1} parent=1 // pred_check
      _
    $region23: #{geo_optimizer_forward.1} parent=1 // pred_check_branch
      %51 = sbr.rel (0) target = $region25
    $region24: #{geo_optimizer_forward.1} parent=1 // pred_region
      _
    $region25: #{geo_optimizer_forward.1} parent=1 // pred_fallthru
      _
    // Predicated region
    $region26: #{geo_optimizer_forward.1} parent=1 // pred_check
      _
    $region27: #{geo_optimizer_forward.1} parent=1 // pred_check_branch
      %53 = sbr.rel (0) target = $region29
    $region28: #{geo_optimizer_forward.1} parent=1 // pred_region
      %55 = dma.done [#allocation3], 3072
    $region29: #{geo_optimizer_forward.1} parent=1 // pred_fallthru
      _
    // Predicated region
    $region30: #{geo_optimizer_forward.1} parent=1 // pred_check
      _
    $region31: #{geo_optimizer_forward.1} parent=1 // pred_check_branch
      %57 = sbr.rel (0) target = $region33
    $region32: #{geo_optimizer_forward.1} parent=1 // pred_region
      %59 = dma.done [#allocation6], 96
    $region33: #{geo_optimizer_forward.1} parent=1 // pred_fallthru
      _
    %v60 = vld [vmem:[%s0] sm:$0x3]
    %v61 = vld [vmem:[#allocation2] sm:$0xff]
    %v62 = vld [vmem:[#allocation2 + $0x8] sm:$0xff]
    %v63 = vld [vmem:[#allocation2 + $0x10] sm:$0xff]
    %v64 = vld [vmem:[#allocation2 + $0x18] sm:$0xff]
    %v65 = vld [vmem:[#allocation2 + $0x20] sm:$0xff]
    %v66 = vld [vmem:[#allocation2 + $0x28] sm:$0xff]
    %v67 = vld [vmem:[#allocation2 + $0x30] sm:$0xff]
    %v68 = vld [vmem:[#allocation2 + $0x38] sm:$0xff]
    %v69 = vld [vmem:[#allocation2 + $0x40] sm:$0xff]
    %v70 = vld [vmem:[#allocation2 + $0x48] sm:$0xff]
    %v71 = vld [vmem:[#allocation2 + $0x50] sm:$0xff]
    %v72 = vld [vmem:[#allocation2 + $0x58] sm:$0xff]
    %v73 = vld [vmem:[#allocation2 + $0x60] sm:$0xff]
    %v74 = vld [vmem:[#allocation2 + $0x68] sm:$0xff]
    %v75 = vld [vmem:[#allocation2 + $0x70] sm:$0xff]
    %v76 = vld [vmem:[#allocation2 + $0x78] sm:$0xff]
    %v77 = vld [vmem:[#allocation2 + $0x80] sm:$0xff]
    %v78 = vld [vmem:[#allocation2 + $0x88] sm:$0xff]
    %v79 = vld [vmem:[#allocation2 + $0x90] sm:$0xff]
    %v80 = vld [vmem:[#allocation2 + $0x98] sm:$0xff]
    %v81 = vld [vmem:[#allocation2 + $0xa0] sm:$0xff]
    %v82 = vld [vmem:[#allocation2 + $0xa8] sm:$0xff]
    %v83 = vld [vmem:[#allocation2 + $0xb0] sm:$0xff]
    %v84 = vld [vmem:[#allocation2 + $0xb8] sm:$0xff]
    %v85 = vld [vmem:[%s3] sm:$0x7]
    %v87 = vperm.slane %v85, 0
    %v88 = vperm.slane %v85, 1
    %v89 = vperm.slane %v85, 2
    %vm93 = vcmask 523264
    %v95 = vsel %vm93, %v60, 0
    %97 = vmatpush.msra.mxu0 0.0
    %98 = vmatpush.msra.mxu0 0.0
    %99 = vmatpush.msra.mxu0 0.0
    %100 = vmatpush.msra.mxu0 0.0
    %101 = vmatpush.msra.mxu0 0.0
    %102 = vmatpush.msra.mxu0 0.0
    %103 = vmatpush.msra.mxu0 0.0
    %104 = vmatpush.msra.mxu0 0.0
    %105 = vmatpush.msra.mxu0 %v82
    %106 = vmatpush.msra.mxu0 %v79
    %107 = vmatpush.msra.mxu0 %v76
    %108 = vmatpush.msra.mxu0 %v73
    %109 = vmatpush.msra.mxu0 %v70
    %110 = vmatpush.msra.mxu0 %v67
    %111 = vmatpush.msra.mxu0 %v64
    %112 = vmatpush.msra.mxu0 %v61
    %113 = vmatmul.f32.gmra.mxu0 %v95
    %v114 = vpop.f32.mrf.mxu0
    %v115 = vadd.f32 %v87, %v114
    %116 = vdwg.mxu0
    %117 = vmatpush.msra.mxu0 0.0
    %118 = vmatpush.msra.mxu0 0.0
    %119 = vmatpush.msra.mxu0 0.0
    %120 = vmatpush.msra.mxu0 0.0
    %121 = vmatpush.msra.mxu0 0.0
    %122 = vmatpush.msra.mxu0 0.0
    %123 = vmatpush.msra.mxu0 0.0
    %124 = vmatpush.msra.mxu0 0.0
    %125 = vmatpush.msra.mxu0 %v83
    %126 = vmatpush.msra.mxu0 %v80
    %127 = vmatpush.msra.mxu0 %v77
    %128 = vmatpush.msra.mxu0 %v74
    %129 = vmatpush.msra.mxu0 %v71
    %130 = vmatpush.msra.mxu0 %v68
    %131 = vmatpush.msra.mxu0 %v65
    %132 = vmatpush.msra.mxu0 %v62
    %133 = vmatmul.f32.gmra.mxu0 %v95
    %v134 = vpop.f32.mrf.mxu0
    %v135 = vadd.f32 %v88, %v134
    %136 = vdwg.mxu0
    %137 = vmatpush.msra.mxu0 0.0
    %138 = vmatpush.msra.mxu0 0.0
    %139 = vmatpush.msra.mxu0 0.0
    %140 = vmatpush.msra.mxu0 0.0
    %141 = vmatpush.msra.mxu0 0.0
    %142 = vmatpush.msra.mxu0 0.0
    %143 = vmatpush.msra.mxu0 0.0
    %144 = vmatpush.msra.mxu0 0.0
    %145 = vmatpush.msra.mxu0 %v84
    %146 = vmatpush.msra.mxu0 %v81
    %147 = vmatpush.msra.mxu0 %v78
    %148 = vmatpush.msra.mxu0 %v75
    %149 = vmatpush.msra.mxu0 %v72
    %150 = vmatpush.msra.mxu0 %v69
    %151 = vmatpush.msra.mxu0 %v66
    %152 = vmatpush.msra.mxu0 %v63
    %153 = vmatmul.f32.gmra.mxu0 %v95
    %v154 = vpop.f32.mrf.mxu0
    %v155 = vadd.f32 %v89, %v154
    %156 = vdwg.mxu0
    %v157 = vld [vmem:[%s1] sm:$0x3f]
    %v161 = vrot.slane %v135, 6
    %v162 = vrot.slane %v155, 4
    %vm163 = vcmask 1041408
    %v164 = vsel %vm163, %v115, %v161
    %vm165 = vcmask 1043456
    %v166 = vsel %vm165, %v164, %v162
    %v168 = vsub.f32 %v157, %v166
    %v169 = vsel %vm163, %v168, 0.0
    %170 = vadd.xlane.f32.xlu0 %v169
    %v171 = vpop.xlane.xlu0 %170
    %v172 = vmul.f32 %v171, 0.0078125
    %v173 = vadd.f32 %v115, %v172
    %174 = vst [vmem:[#allocation7] sm:$0x3] %v173
    %vm175 = vcmask 1024
    %176 = vst.msk [vmem:[#allocation11] sm:$0x3] %vm175, %v172
    %178 = vst [vmem:[#allocation1] ss:$4 sm:$0xff] %v168
    %v179 = vld.sshfl [vmem:[#allocation1 + $0x8] sm:$0xff pattern:$0x73625140]
    %v181 = vsel %vm163, %v179, 0.0
    %182 = vadd.xlane.f32.xlu0 %v181
    %v183 = vpop.xlane.xlu0 %182
    %v184 = vmul.f32 %v183, 0.0078125
    %v185 = vadd.f32 %v135, %v184
    %186 = vst [vmem:[#allocation7 + $0x2] sm:$0x3] %v185
    %vm187 = vcmask 9224
    %188 = vst.msk [vmem:[#allocation11] sm:$0x3] %vm187, %v184
    %189 = vst [vmem:[#allocation1] ss:$4 sm:$0xff] %v168
    %v190 = vld.sshfl [vmem:[#allocation1 + $0x10] sm:$0xff pattern:$0x73625140]
    %v192 = vsel %vm163, %v190, 0.0
    %193 = vadd.xlane.f32.xlu0 %v192
    %v194 = vpop.xlane.xlu0 %193
    %v195 = vmul.f32 %v194, 0.0078125
    %v196 = vadd.f32 %v155, %v195
    %197 = vst [vmem:[#allocation7 + $0x4] sm:$0x3] %v196
    %vm198 = vcmask 17424
    %199 = vst.msk [vmem:[#allocation11] sm:$0x3] %vm198, %v195
    %v200 = vmul.f32 %v60, %v60
    %202 = vrot.lane.b32.xlu0 %v200, 70
    %v203 = vpop.permute.xlu0 %202
    %vm205 = vcmask 17408
    %v206 = vsel %vm205, %v203, 0.0
    %207 = vadd.xlane.f32.xlu0 %v206
    %v208 = vpop.xlane.xlu0 %207
    %v209 = vadd.f32 %v208, 1e-12
    %v210 = vrsqrt.pop %v209
    %v211 = vmul.f32 %v210, %v209
    %v212 = vmul.f32 %v211, %v210
    %v213 = vmul.f32 0.5, %v212
    %v214 = vsub.f32 1.5, %v213
    %v215 = vmul.f32 %v210, %v214
    %v216 = vmul.f32 %v209, %v215
    %vm217 = vcmp.eq.f32.partialorder %v209, inf
    %v218 = vsel %vm217, %v209, %v216
    %vm219 = vcmp.eq.f32.partialorder %v209, 0.0
    %v220 = vand.u32 %v209, 2147483648
    %v221 = vsel %vm219, %v220, %v218
    %v222 = vrcp.pop %v221
    %v223 = vmul.f32 %v221, %v222
    %v224 = vsub.f32 1.0, %v223
    %v225 = vmul.f32 %v222, %v224
    %v226 = vadd.f32 %v222, %v225
    %vm227 = vweird.f32 %v221
    %vm228 = vweird.f32 %v222
    %vm229 = vmor %vm227, %vm228
    %v230 = vsel %vm229, %v222, %v226
    %v231 = vand.u32 2147483647, %v221
    %vm232 = vcmp.eq.f32.partialorder %v231, 8.507059e+37
    %v233 = vand.u32 %v221, 2147483648
    %v234 = vor.u32 1.1754944e-38, %v233
    %v235 = vsel %vm232, %v234, %v230
    %v236 = vmul.f32 %v60, %v235
    %v237 = vand.u32 2147483647, %v221
    %vm238 = vcmp.le.f32.partialorder %v237, 0.7853982
    %vm239 = vcmp.lt.s32.totalorder %v221, 0
    %v240 = vand.u32 %v221, 2139095040
    %v241 = vshrl.u32 %v240, 23
    %v242 = vsub.s32 %v241, 127
    %v243 = vand.u32 2147483647, %v221
    %v244 = vand.u32 %v243, 8388607
    %v245 = vor.u32 %v244, 8388608
    %v246 = vsub.s32 0, %v245
    %v247 = vadd.s32 %v242, 1
    %vm248 = vcmp.gt.s32.totalorder %v247, 0
    %v249 = vsel %vm248, %v247, 0
    %v250 = vshrl.u32 %v249, 5
    %v251 = vand.u32 %v249, 31
    %v252 = vsub.s32 32, %v251
    %v253 = vshrl.u32 683565275, %v252
    %v254 = vshll.u32 683565275, %v251
    %v255 = vshrl.u32 2475754826, %v252
    %v256 = vor.u32 %v254, %v255
    %v257 = vshll.u32 2475754826, %v251
    %v258 = vshrl.u32 2131351028, %v252
    %v259 = vor.u32 %v257, %v258
    %v260 = vshll.u32 2131351028, %v251
    %v261 = vshrl.u32 2102212464, %v252
    %v262 = vor.u32 %v260, %v261
    %v263 = vshll.u32 2102212464, %v251
    %v264 = vshrl.u32 920167782, %v252
    %v265 = vor.u32 %v263, %v264
    %v266 = vshll.u32 920167782, %v251
    %v267 = vshrl.u32 1326507024, %v252
    %v268 = vor.u32 %v266, %v267
    %vm269 = vcmp.lt.s32.totalorder %v250, 1
    %vm270 = vcmp.lt.s32.totalorder %v250, 2
    %vm271 = vcmp.lt.s32.totalorder %v250, 3
    %vm272 = vcmp.lt.s32.totalorder %v250, 4
    %v273 = vsel %vm269, %v253, %v256
    %v274 = vsel %vm272, %v262, 2102212464
    %v275 = vsel %vm271, %v259, %v274
    %v276 = vsel %vm270, %v273, %v275
    %v277 = vsel %vm269, %v256, %v259
    %v278 = vsel %vm272, %v265, 920167782
    %v279 = vsel %vm271, %v262, %v278
    %v280 = vsel %vm270, %v277, %v279
    %v281 = vsel %vm269, %v259, %v262
    %v282 = vsel %vm272, %v268, 1326507024
    %v283 = vsel %vm271, %v265, %v282
    %v284 = vsel %vm270, %v281, %v283
    %v285 = vshll.u32 %v245, 8
    %v286 = vand.u32 %v285, 65535
    %v287 = vshrl.u32 %v285, 16
    %v288 = vand.u32 %v284, 65535
    %v289 = vshrl.u32 %v284, 16
    %v290 = vmul.u32 %v286, %v288
    %v291 = vmul.u32 %v286, %v289
    %v292 = vmul.u32 %v287, %v288
    %v293 = vmul.u32 %v287, %v289
    %v294 = vshll.u32 %v291, 16
    %v295 = vshrl.u32 %v291, 16
    %v296 = vshll.u32 %v292, 16
    %v297 = vshrl.u32 %v292, 16
    %vm298 = vc.u32 %v290, %v294
    %v299 = vsel %vm298, 1, 0
    %v300 = vadd.s32 %v290, %v294
    %v301 = vadd.s32 %v293, %v299
    %vm302 = vc.u32 %v300, %v296
    %v303 = vsel %vm302, 1, 0
    %v304 = vadd.s32 %v300, %v296
    %v305 = vadd.s32 %v301, %v303
    %v306 = vadd.s32 %v305, %v295
    %v307 = vadd.s32 %v306, %v297
    %v308 = vand.u32 %v285, 65535
    %v309 = vshrl.u32 %v285, 16
    %v310 = vand.u32 %v280, 65535
    %v311 = vshrl.u32 %v280, 16
    %v312 = vmul.u32 %v308, %v310
    %v313 = vmul.u32 %v308, %v311
    %v314 = vmul.u32 %v309, %v310
    %v315 = vmul.u32 %v309, %v311
    %v316 = vshll.u32 %v313, 16
    %v317 = vshrl.u32 %v313, 16
    %v318 = vshll.u32 %v314, 16
    %v319 = vshrl.u32 %v314, 16
    %vm320 = vc.u32 %v312, %v316
    %v321 = vsel %vm320, 1, 0
    %v322 = vadd.s32 %v312, %v316
    %v323 = vadd.s32 %v315, %v321
    %vm324 = vc.u32 %v322, %v318
    %v325 = vsel %vm324, 1, 0
    %v326 = vadd.s32 %v322, %v318
    %v327 = vadd.s32 %v323, %v325
    %v328 = vadd.s32 %v327, %v317
    %v329 = vadd.s32 %v328, %v319
    %v330 = vmul.u32 %v285, %v276
    %v331 = vadd.s32 %v307, %v326
    %vm332 = vc.u32 %v307, %v326
    %v333 = vadd.s32 %v329, 1
    %v334 = vsel %vm332, %v333, %v329
    %v335 = vadd.s32 %v330, %v334
    %v336 = vadd.s32 %v335, 536870912
    %v337 = vshrl.u32 %v336, 30
    %v338 = vshll.u32 %v337, 30
    %v339 = vsub.s32 %v335, %v338
    %vm340 = vcmp.lt.s32.totalorder %v339, 0
    %v341 = vsub.s32 0, %v339
    %v342 = vsel %vm340, %v341, %v339
    %v343 = vclz %v342
    %v344 = vsub.s32 %v343, 2
    %vm345 = vcmp.gt.s32.totalorder 0, %v344
    %v346 = vsel %vm345, 0, %v344
    %v347 = vsub.s32 32, %v346
    %v348 = vshll.u32 %v339, %v346
    %v349 = vshrl.u32 %v331, %v347
    %v350 = vor.u32 %v348, %v349
    %v351 = vsub.s32 4294967266, %v346
    %v352 = vadd.s32 %v351, 127
    %v353 = vshll.u32 %v352, 23
    %v354 = vor.u32 4788187, %v353
    %v355 = vand.u32 2147483647, %v354
    %v357 = vcvt.s32.f32 %v350
    %v358 = vmul.f32 %v357, %v355
    %v359 = vxor.u32 %v358, 2147483648
    %v360 = vsel %vm239, %v359, %v358
    %v361 = vsub.s32 4, %v337
    %v362 = vsel %vm239, %v361, %v337
    %v363 = vsel %vm238, %v221, %v360
    %v364 = vsel %vm238, 0, %v362
    %v365 = vmul.f32 %v363, %v363
    %v366 = vmul.f32 %v365, -0.001358992
    %v367 = vadd.f32 %v366, 0.041655596
    %v368 = vmul.f32 %v365, %v367
    %v369 = vadd.f32 %v368, -0.4999988
    %v370 = vmul.f32 %v365, %v369
    %v371 = vadd.f32 1.0, %v370
    %v372 = vmul.f32 %v363, %v363
    %v373 = vmul.f32 %v372, -0.00019511016
    %v374 = vadd.f32 %v373, 0.008332121
    %v375 = vmul.f32 %v372, %v374
    %v376 = vadd.f32 %v375, -0.16666654
    %v377 = vmul.f32 %v372, %v376
    %v378 = vadd.f32 %v377, 1.0
    %v379 = vmul.f32 %v378, %v363
    %vm380 = vweird.f32 %v221
    %v381 = vadd.s32 %v364, 3
    %v382 = vand.u32 %v381, 3
    %vm383 = vcmp.lt.s32.totalorder %v382, 2
    %vm384 = vcmp.eq.s32.totalorder %v382, 0
    %v385 = vxor.u32 %v379, 2147483648
    %v386 = vsel %vm384, %v371, %v385
    %vm387 = vcmp.eq.s32.totalorder %v382, 2
    %v388 = vxor.u32 %v371, 2147483648
    %v389 = vsel %vm387, %v388, %v379
    %v390 = vsel %vm383, %v386, %v389
    %v391 = vsel %vm380, nan, %v390
    %v392 = vand.u32 2147483647, %v221
    %vm393 = vcmp.le.f32.partialorder %v392, 0.7853982
    %vm394 = vcmp.lt.s32.totalorder %v221, 0
    %v395 = vand.u32 %v221, 2139095040
    %v396 = vshrl.u32 %v395, 23
    %v397 = vsub.s32 %v396, 127
    %v398 = vand.u32 2147483647, %v221
    %v399 = vand.u32 %v398, 8388607
    %v400 = vor.u32 %v399, 8388608
    %v401 = vsub.s32 0, %v400
    %v402 = vadd.s32 %v397, 1
    %vm403 = vcmp.gt.s32.totalorder %v402, 0
    %v404 = vsel %vm403, %v402, 0
    %v405 = vshrl.u32 %v404, 5
    %v406 = vand.u32 %v404, 31
    %v407 = vsub.s32 32, %v406
    %v408 = vshrl.u32 683565275, %v407
    %v409 = vshll.u32 683565275, %v406
    %v410 = vshrl.u32 2475754826, %v407
    %v411 = vor.u32 %v409, %v410
    %v412 = vshll.u32 2475754826, %v406
    %v413 = vshrl.u32 2131351028, %v407
    %v414 = vor.u32 %v412, %v413
    %v415 = vshll.u32 2131351028, %v406
    %v416 = vshrl.u32 2102212464, %v407
    %v417 = vor.u32 %v415, %v416
    %v418 = vshll.u32 2102212464, %v406
    %v419 = vshrl.u32 920167782, %v407
    %v420 = vor.u32 %v418, %v419
    %v421 = vshll.u32 920167782, %v406
    %v422 = vshrl.u32 1326507024, %v407
    %v423 = vor.u32 %v421, %v422
    %vm424 = vcmp.lt.s32.totalorder %v405, 1
    %vm425 = vcmp.lt.s32.totalorder %v405, 2
    %vm426 = vcmp.lt.s32.totalorder %v405, 3
    %vm427 = vcmp.lt.s32.totalorder %v405, 4
    %v428 = vsel %vm424, %v408, %v411
    %v429 = vsel %vm427, %v417, 2102212464
    %v430 = vsel %vm426, %v414, %v429
    %v431 = vsel %vm425, %v428, %v430
    %v432 = vsel %vm424, %v411, %v414
    %v433 = vsel %vm427, %v420, 920167782
    %v434 = vsel %vm426, %v417, %v433
    %v435 = vsel %vm425, %v432, %v434
    %v436 = vsel %vm424, %v414, %v417
    %v437 = vsel %vm427, %v423, 1326507024
    %v438 = vsel %vm426, %v420, %v437
    %v439 = vsel %vm425, %v436, %v438
    %v440 = vshll.u32 %v400, 8
    %v441 = vand.u32 %v440, 65535
    %v442 = vshrl.u32 %v440, 16
    %v443 = vand.u32 %v439, 65535
    %v444 = vshrl.u32 %v439, 16
    %v445 = vmul.u32 %v441, %v443
    %v446 = vmul.u32 %v441, %v444
    %v447 = vmul.u32 %v442, %v443
    %v448 = vmul.u32 %v442, %v444
    %v449 = vshll.u32 %v446, 16
    %v450 = vshrl.u32 %v446, 16
    %v451 = vshll.u32 %v447, 16
    %v452 = vshrl.u32 %v447, 16
    %vm453 = vc.u32 %v445, %v449
    %v454 = vsel %vm453, 1, 0
    %v455 = vadd.s32 %v445, %v449
    %v456 = vadd.s32 %v448, %v454
    %vm457 = vc.u32 %v455, %v451
    %v458 = vsel %vm457, 1, 0
    %v459 = vadd.s32 %v455, %v451
    %v460 = vadd.s32 %v456, %v458
    %v461 = vadd.s32 %v460, %v450
    %v462 = vadd.s32 %v461, %v452
    %v463 = vand.u32 %v440, 65535
    %v464 = vshrl.u32 %v440, 16
    %v465 = vand.u32 %v435, 65535
    %v466 = vshrl.u32 %v435, 16
    %v467 = vmul.u32 %v463, %v465
    %v468 = vmul.u32 %v463, %v466
    %v469 = vmul.u32 %v464, %v465
    %v470 = vmul.u32 %v464, %v466
    %v471 = vshll.u32 %v468, 16
    %v472 = vshrl.u32 %v468, 16
    %v473 = vshll.u32 %v469, 16
    %v474 = vshrl.u32 %v469, 16
    %vm475 = vc.u32 %v467, %v471
    %v476 = vsel %vm475, 1, 0
    %v477 = vadd.s32 %v467, %v471
    %v478 = vadd.s32 %v470, %v476
    %vm479 = vc.u32 %v477, %v473
    %v480 = vsel %vm479, 1, 0
    %v481 = vadd.s32 %v477, %v473
    %v482 = vadd.s32 %v478, %v480
    %v483 = vadd.s32 %v482, %v472
    %v484 = vadd.s32 %v483, %v474
    %v485 = vmul.u32 %v440, %v431
    %v486 = vadd.s32 %v462, %v481
    %vm487 = vc.u32 %v462, %v481
    %v488 = vadd.s32 %v484, 1
    %v489 = vsel %vm487, %v488, %v484
    %v490 = vadd.s32 %v485, %v489
    %v491 = vadd.s32 %v490, 536870912
    %v492 = vshrl.u32 %v491, 30
    %v493 = vshll.u32 %v492, 30
    %v494 = vsub.s32 %v490, %v493
    %vm495 = vcmp.lt.s32.totalorder %v494, 0
    %v496 = vsub.s32 0, %v494
    %v497 = vsel %vm495, %v496, %v494
    %v498 = vclz %v497
    %v499 = vsub.s32 %v498, 2
    %vm500 = vcmp.gt.s32.totalorder 0, %v499
    %v501 = vsel %vm500, 0, %v499
    %v502 = vsub.s32 32, %v501
    %v503 = vshll.u32 %v494, %v501
    %v504 = vshrl.u32 %v486, %v502
    %v505 = vor.u32 %v503, %v504
    %v506 = vsub.s32 4294967266, %v501
    %v507 = vadd.s32 %v506, 127
    %v508 = vshll.u32 %v507, 23
    %v509 = vor.u32 4788187, %v508
    %v510 = vand.u32 2147483647, %v509
    %v512 = vcvt.s32.f32 %v505
    %v513 = vmul.f32 %v512, %v510
    %v514 = vxor.u32 %v513, 2147483648
    %v515 = vsel %vm394, %v514, %v513
    %v516 = vsub.s32 4, %v492
    %v517 = vsel %vm394, %v516, %v492
    %v518 = vsel %vm393, %v221, %v515
    %v519 = vsel %vm393, 0, %v517
    %v520 = vmul.f32 %v518, %v518
    %v521 = vmul.f32 %v520, -0.001358992
    %v522 = vadd.f32 %v521, 0.041655596
    %v523 = vmul.f32 %v520, %v522
    %v524 = vadd.f32 %v523, -0.4999988
    %v525 = vmul.f32 %v520, %v524
    %v526 = vadd.f32 1.0, %v525
    %v527 = vmul.f32 %v518, %v518
    %v528 = vmul.f32 %v527, -0.00019511016
    %v529 = vadd.f32 %v528, 0.008332121
    %v530 = vmul.f32 %v527, %v529
    %v531 = vadd.f32 %v530, -0.16666654
    %v532 = vmul.f32 %v527, %v531
    %v533 = vadd.f32 %v532, 1.0
    %v534 = vmul.f32 %v533, %v518
    %vm535 = vweird.f32 %v221
    %v536 = vand.u32 %v519, 3
    %vm537 = vcmp.lt.s32.totalorder %v536, 2
    %vm538 = vcmp.eq.s32.totalorder %v536, 0
    %v539 = vxor.u32 %v534, 2147483648
    %v540 = vsel %vm538, %v526, %v539
    %vm541 = vcmp.eq.s32.totalorder %v536, 2
    %v542 = vxor.u32 %v526, 2147483648
    %v543 = vsel %vm541, %v542, %v534
    %v544 = vsel %vm537, %v540, %v543
    %v545 = vsel %vm535, nan, %v544
    %v546 = vsub.f32 1.0, %v545
    %v547 = vmul.f32 %v546, %v236
    %v548 = vmul.f32 %v547, %v236
    %v549 = vadd.f32 %v545, %v548
    %551 = vrot.lane.b32.xlu0 %v236, 127
    %v552 = vpop.permute.xlu0 %551
    %v554 = vmul.f32 %v547, %v552
    %v555 = vmul.f32 %v391, %v236
    %557 = vrot.lane.b32.xlu0 %v555, 126
    %v558 = vpop.permute.xlu0 %557
    %v560 = vsub.f32 %v554, %v558
    %561 = vrot.lane.b32.xlu0 %v236, 126
    %v562 = vpop.permute.xlu0 %561
    %v564 = vmul.f32 %v547, %v562
    %565 = vrot.lane.b32.xlu0 %v555, 127
    %v566 = vpop.permute.xlu0 %565
    %v568 = vadd.f32 %v564, %v566
    %v569 = vadd.f32 %v554, %v558
    %570 = vrot.lane.b32.xlu0 %v555, 1
    %v571 = vpop.permute.xlu0 %570
    %v573 = vsub.f32 %v554, %v571
    %v574 = vsub.f32 %v564, %v566
    %v575 = vadd.f32 %v554, %v571
    %v576 = vld [vmem:[#allocation5] sm:$0x3f]
    %v577 = vld [vmem:[%s5] sm:$0x3f]
    %579 = vset.pattern.permute.xlu0 58
    %580 = vperm.xlu0 %579, %v549
    %v581 = vpop.permute.xlu0 %580
    %v583 = vmul.f32 %v581, %v576
    %585 = vset.pattern.permute.xlu0 58
    %586 = vperm.xlu0 %585, %v560
    %v587 = vpop.permute.xlu0 %586
    %590 = vst [vmem:[#allocation1] ss:$4 sm:$0xff] %v576
    %v591 = vld.sshfl [vmem:[#allocation1 + $0x8] sm:$0xff pattern:$0x73625140]
    %v593 = vmul.f32 %v587, %v591
    %v594 = vadd.f32 %v583, %v593
    %596 = vset.pattern.permute.xlu0 58
    %597 = vperm.xlu0 %596, %v568
    %v598 = vpop.permute.xlu0 %597
    %600 = vst [vmem:[#allocation1] ss:$4 sm:$0xff] %v576
    %v601 = vld.sshfl [vmem:[#allocation1 + $0x10] sm:$0xff pattern:$0x73625140]
    %v603 = vmul.f32 %v598, %v601
    %v604 = vadd.f32 %v594, %v603
    %605 = vset.pattern.permute.xlu0 61
    %606 = vperm.xlu0 %605, %v60
    %v607 = vpop.permute.xlu0 %606
    %v609 = vadd.f32 %v604, %v607
    %v610 = vmul.f32 %v581, %v577
    %612 = vst [vmem:[#allocation1] ss:$4 sm:$0xff] %v577
    %v613 = vld.sshfl [vmem:[#allocation1 + $0x8] sm:$0xff pattern:$0x73625140]
    %v615 = vmul.f32 %v587, %v613
    %v616 = vadd.f32 %v610, %v615
    %617 = vst [vmem:[#allocation1] ss:$4 sm:$0xff] %v577
    %v618 = vld.sshfl [vmem:[#allocation1 + $0x10] sm:$0xff pattern:$0x73625140]
    %v620 = vmul.f32 %v598, %v618
    %v621 = vadd.f32 %v616, %v620
    %622 = vst [vmem:[#allocation8] sm:$0x3] %v609
    %623 = vst [vmem:[#allocation10] sm:$0x3] %v621
    %625 = vset.pattern.permute.xlu0 58
    %626 = vperm.xlu0 %625, %v569
    %v627 = vpop.permute.xlu0 %626
    %v629 = vmul.f32 %v627, %v576
    %630 = vset.pattern.permute.xlu0 59
    %631 = vperm.xlu0 %630, %v549
    %v632 = vpop.permute.xlu0 %631
    %634 = vst [vmem:[#allocation1] ss:$4 sm:$0xff] %v576
    %v635 = vld.sshfl [vmem:[#allocation1 + $0x8] sm:$0xff pattern:$0x73625140]
    %v637 = vmul.f32 %v632, %v635
    %v638 = vadd.f32 %v629, %v637
    %640 = vset.pattern.permute.xlu0 59
    %641 = vperm.xlu0 %640, %v573
    %v642 = vpop.permute.xlu0 %641
    %644 = vst [vmem:[#allocation1] ss:$4 sm:$0xff] %v576
    %v645 = vld.sshfl [vmem:[#allocation1 + $0x10] sm:$0xff pattern:$0x73625140]
    %v647 = vmul.f32 %v642, %v645
    %v648 = vadd.f32 %v638, %v647
    %649 = vset.pattern.permute.xlu0 62
    %650 = vperm.xlu0 %649, %v60
    %v651 = vpop.permute.xlu0 %650
    %v653 = vadd.f32 %v648, %v651
    %v654 = vmul.f32 %v627, %v577
    %655 = vst [vmem:[#allocation1] ss:$4 sm:$0xff] %v577
    %v656 = vld.sshfl [vmem:[#allocation1 + $0x8] sm:$0xff pattern:$0x73625140]
    %v658 = vmul.f32 %v632, %v656
    %v659 = vadd.f32 %v654, %v658
    %660 = vst [vmem:[#allocation1] ss:$4 sm:$0xff] %v577
    %v661 = vld.sshfl [vmem:[#allocation1 + $0x10] sm:$0xff pattern:$0x73625140]
    %v663 = vmul.f32 %v642, %v661
    %v664 = vadd.f32 %v659, %v663
    %665 = vst [vmem:[#allocation8 + $0x2] sm:$0x3] %v653
    %666 = vst [vmem:[#allocation10 + $0x2] sm:$0x3] %v664
    %668 = vset.pattern.permute.xlu0 58
    %669 = vperm.xlu0 %668, %v574
    %v670 = vpop.permute.xlu0 %669
    %v672 = vmul.f32 %v670, %v576
    %674 = vset.pattern.permute.xlu0 59
    %675 = vperm.xlu0 %674, %v575
    %v676 = vpop.permute.xlu0 %675
    %678 = vst [vmem:[#allocation1] ss:$4 sm:$0xff] %v576
    %v679 = vld.sshfl [vmem:[#allocation1 + $0x8] sm:$0xff pattern:$0x73625140]
    %v681 = vmul.f32 %v676, %v679
    %v682 = vadd.f32 %v672, %v681
    %683 = vset.pattern.permute.xlu0 60
    %684 = vperm.xlu0 %683, %v549
    %v685 = vpop.permute.xlu0 %684
    %687 = vst [vmem:[#allocation1] ss:$4 sm:$0xff] %v576
    %v688 = vld.sshfl [vmem:[#allocation1 + $0x10] sm:$0xff pattern:$0x73625140]
    %v690 = vmul.f32 %v685, %v688
    %v691 = vadd.f32 %v682, %v690
    %692 = vset.pattern.permute.xlu0 63
    %693 = vperm.xlu0 %692, %v60
    %v694 = vpop.permute.xlu0 %693
    %v696 = vadd.f32 %v691, %v694
    %v697 = vmul.f32 %v670, %v577
    %698 = vst [vmem:[#allocation1] ss:$4 sm:$0xff] %v577
    %v699 = vld.sshfl [vmem:[#allocation1 + $0x8] sm:$0xff pattern:$0x73625140]
    %v701 = vmul.f32 %v676, %v699
    %v702 = vadd.f32 %v697, %v701
    %703 = vst [vmem:[#allocation1] ss:$4 sm:$0xff] %v577
    %v704 = vld.sshfl [vmem:[#allocation1 + $0x10] sm:$0xff pattern:$0x73625140]
    %v706 = vmul.f32 %v685, %v704
    %v707 = vadd.f32 %v702, %v706
    %708 = vst [vmem:[#allocation8 + $0x4] sm:$0x3] %v696
    %709 = vst [vmem:[#allocation10 + $0x4] sm:$0x3] %v707
    // Predicated region
    $region34: #{geo_optimizer_forward.1} parent=1 // pred_check
      _
    $region35: #{geo_optimizer_forward.1} parent=1 // pred_check_branch
      %711 = sbr.rel (0) target = $region37
    $region36: #{geo_optimizer_forward.1} parent=1 // pred_region
      %713 = vsyncadd [#allocation4], 0
      %s715 = sshll.u32 [#allocation7], 4
      %s716 = int_to_ptr.vmem [resolvable:$true] %s715
      %s717 = sshll.u32 %s6, 4
      %s718 = int_to_ptr.hbm [resolvable:$true] %s717
      %720 = dma.vmem_to_hbm [thread:$0]  %s716, 96, %s718, [#allocation4]
    $region37: #{geo_optimizer_forward.1} parent=1 // pred_fallthru
      _
    // Predicated region
    $region38: #{geo_optimizer_forward.1} parent=1 // pred_check
      _
    $region39: #{geo_optimizer_forward.1} parent=1 // pred_check_branch
      %722 = sbr.rel (0) target = $region41
    $region40: #{geo_optimizer_forward.1} parent=1 // pred_region
      %724 = vsyncadd [#allocation9], 0
      %s726 = sshll.u32 [#allocation8], 4
      %s727 = int_to_ptr.vmem [resolvable:$true] %s726
      %s728 = sshll.u32 %s7, 4
      %s729 = int_to_ptr.hbm [resolvable:$true] %s728
      %731 = dma.vmem_to_hbm [thread:$0]  %s727, 96, %s729, [#allocation9]
    $region41: #{geo_optimizer_forward.1} parent=1 // pred_fallthru
      _
    // Predicated region
    $region42: #{geo_optimizer_forward.1} parent=1 // pred_check
      _
    $region43: #{geo_optimizer_forward.1} parent=1 // pred_check_branch
      %733 = sbr.rel (0) target = $region45
    $region44: #{geo_optimizer_forward.1} parent=1 // pred_region
      %735 = vsyncadd [#allocation9], 0
      %s737 = sshll.u32 [#allocation10], 4
      %s738 = int_to_ptr.vmem [resolvable:$true] %s737
      %s739 = sshll.u32 %s8, 4
      %s740 = int_to_ptr.hbm [resolvable:$true] %s739
      %742 = dma.vmem_to_hbm [thread:$0]  %s738, 96, %s740, [#allocation9]
    $region45: #{geo_optimizer_forward.1} parent=1 // pred_fallthru
      _
    // Predicated region
    $region46: #{geo_optimizer_forward.1} parent=1 // pred_check
      _
    $region47: #{geo_optimizer_forward.1} parent=1 // pred_check_branch
      %744 = sbr.rel (0) target = $region49
    $region48: #{geo_optimizer_forward.1} parent=1 // pred_region
      %746 = vsyncadd [#allocation12], 0
      %s748 = sshll.u32 [#allocation11], 4
      %s749 = int_to_ptr.vmem [resolvable:$true] %s748
      %s750 = sshll.u32 %s9, 4
      %s751 = int_to_ptr.hbm [resolvable:$true] %s750
      %753 = dma.vmem_to_hbm [thread:$0]  %s749, 32, %s751, [#allocation12]
    $region49: #{geo_optimizer_forward.1} parent=1 // pred_fallthru
      _
    // Predicated region
    $region50: #{geo_optimizer_forward.1} parent=1 // pred_check
      _
    $region51: #{geo_optimizer_forward.1} parent=1 // pred_check_branch
      %755 = sbr.rel (0) target = $region53
    $region52: #{geo_optimizer_forward.1} parent=1 // pred_region
      %757 = dma.done [#allocation4], 96
    $region53: #{geo_optimizer_forward.1} parent=1 // pred_fallthru
      _
    // Predicated region
    $region54: #{geo_optimizer_forward.1} parent=1 // pred_check
      _
    $region55: #{geo_optimizer_forward.1} parent=1 // pred_check_branch
      %759 = sbr.rel (0) target = $region57
    $region56: #{geo_optimizer_forward.1} parent=1 // pred_region
      %761 = dma.done [#allocation9], 96
    $region57: #{geo_optimizer_forward.1} parent=1 // pred_fallthru
      _
    // Predicated region
    $region58: #{geo_optimizer_forward.1} parent=1 // pred_check
      _
    $region59: #{geo_optimizer_forward.1} parent=1 // pred_check_branch
      %763 = sbr.rel (0) target = $region61
    $region60: #{geo_optimizer_forward.1} parent=1 // pred_region
      %765 = dma.done [#allocation9], 96
    $region61: #{geo_optimizer_forward.1} parent=1 // pred_fallthru
      _
    // Predicated region
    $region62: #{geo_optimizer_forward.1} parent=1 // pred_check
      _
    $region63: #{geo_optimizer_forward.1} parent=1 // pred_check_branch
      %767 = sbr.rel (0) target = $region65
    $region64: #{geo_optimizer_forward.1} parent=1 // pred_region
      %769 = dma.done [#allocation12], 32
    $region65: #{geo_optimizer_forward.1} parent=1 // pred_fallthru
      _
    %770 = vsyncpa [#allocation3], 1
    %771 = vsyncpa [#allocation6], 1
    %772 = vsyncpa [#allocation4], 1
    %773 = vsyncpa [#allocation9], 1
    %774 = vsyncpa [#allocation12], 1

</llo_original>
